<compile_context>
chip_gen: v7x
topology: tpu7x:2x2x1
jax: 0.10.0
libtpu: 0.0.40
codegen_flags: <defaults>
</compile_context>

<pallas_src>
import jax
import jax.numpy as jnp
from jax import lax
from jax.experimental import pallas as pl
from jax.experimental.pallas import tpu as pltpu


def _round_up(x, m):
    return (x + m - 1) // m * m


def _q_mlp_kernel(s_ref, a_ref, w1s_ref, w1a_ref, b1_ref, w2_ref, b2_ref,
                  w3_ref, b3_ref, o_ref):
    """One batch tile of the fused 3-layer MLP, in transposed (batch-on-lanes) layout.

    s_ref   : [TB, Ds]      a_ref  : [TB, Da]        (row-major batch tiles)
    w1s_ref : [H1, Ds]      w1a_ref: [H1, Da]        (torch layout [out, in])
    b1_ref  : [H1, 1]       w2_ref : [H2, H1]        b2_ref: [H2, 1]
    w3_ref  : [1, H2]       b3_ref : SMEM (1,)
    o_ref   : [1, 1, TB]
    """
    # Contract the feature dim of both operands:  W[out,in] . X[TB,in]^T -> [out, TB]
    dn = (((1,), (1,)), ((), ()))

    # h1^T = W1_s @ s^T + W1_a @ a^T + b1        -> [H1, TB]  (fused concat)
    h1 = lax.dot_general(w1s_ref[...], s_ref[...], dn,
                         preferred_element_type=jnp.float32)
    h1 = h1 + lax.dot_general(w1a_ref[...], a_ref[...], dn,
                              preferred_element_type=jnp.float32)
    h1 = jnp.maximum(h1 + b1_ref[...], 0.0)

    # h2^T = W2 @ h1^T + b2                      -> [H2, TB]
    h2 = jnp.dot(w2_ref[...], h1, preferred_element_type=jnp.float32)
    h2 = jnp.maximum(h2 + b2_ref[...], 0.0)

    # q^T  = W3 @ h2^T + b3                      -> [1, TB]   (lane-dense store)
    q = jnp.dot(w3_ref[...], h2, preferred_element_type=jnp.float32) + b3_ref[0]
    o_ref[...] = q[None].astype(o_ref.dtype)


def q_value_forward(state, action, params, *, tile_rows=2048):
    """Q(s, a): state [B, Ds], action [B, Da]  ->  [B, 1]."""
    w1, b1, w2, b2, w3, b3 = params
    B, ds = state.shape
    da = action.shape[1]
    h1, h2 = w1.shape[0], w2.shape[0]

    # Fuse the concat: split first-layer weight instead of materializing cat([s, a]).
    w1s = w1[:, :ds]
    w1a = w1[:, ds:]
    b1c = b1.reshape(h1, 1)
    b2c = b2.reshape(h2, 1)
    b3s = b3.reshape(1)

    # Batch tiling: TB rows per grid step, multiple of 128 so transposed [*, TB]
    # activations and the [1, TB] output are lane-dense.
    tb = min(_round_up(tile_rows, 128), _round_up(B, 128))
    bp = _round_up(B, tb)
    num_tiles = bp // tb
    if bp != B:
        pad = ((0, bp - B), (0, 0))
        state = jnp.pad(state, pad)
        action = jnp.pad(action, pad)

    def resident(shape):  # VMEM-resident weight/bias: constant index_map, DMA'd once
        return pl.BlockSpec(shape, lambda i: (0, 0))

    out = pl.pallas_call(
        _q_mlp_kernel,
        out_shape=jax.ShapeDtypeStruct((num_tiles, 1, tb), jnp.float32),
        grid=(num_tiles,),
        in_specs=[
            pl.BlockSpec((tb, ds), lambda i: (i, 0)),           # state tile
            pl.BlockSpec((tb, da), lambda i: (i, 0)),           # action tile
            resident((h1, ds)),                                 # w1_state
            resident((h1, da)),                                 # w1_action
            resident((h1, 1)),                                  # b1
            resident((h2, h1)),                                 # w2
            resident((h2, 1)),                                  # b2
            resident((1, h2)),                                  # w3
            pl.BlockSpec(memory_space=pltpu.MemorySpace.SMEM),  # b3 scalar
        ],
        out_specs=pl.BlockSpec((1, 1, tb), lambda i: (i, 0, 0)),
        compiler_params=pltpu.CompilerParams(
            dimension_semantics=("parallel",)),                 # megacore on v7x
    )(state, action, w1s, w1a, b1c, w2, b2c, w3, b3s)

    return out.reshape(bp)[:B].reshape(B, 1)


def make_params(key, input_dim_critic, action_dim, hidden=(64, 64)):
    """Torch-layout params ([out, in] weights), orthogonal init, small random biases."""
    dims = [input_dim_critic + action_dim, hidden[0], hidden[1], 1]
    ortho = jax.nn.initializers.orthogonal()
    params = []
    for i in range(3):
        key, kw, kb = jax.random.split(key, 3)
        w = ortho(kw, (dims[i + 1], dims[i]), jnp.float32)          # [out, in]
        b = 0.1 * jax.random.normal(kb, (dims[i + 1],), jnp.float32)
        params.extend([w, b])
    return tuple(params)


def reference_forward(state, action, params):
    """Pure-JAX reference (mirrors the PyTorch module)."""
    w1, b1, w2, b2, w3, b3 = params
    x = jnp.concatenate([state, action], axis=1)
    h1 = jnp.maximum(x @ w1.T + b1, 0.0)
    h2 = jnp.maximum(h1 @ w2.T + b2, 0.0)
    return h2 @ w3.T + b3


if __name__ == "__main__":
    key = jax.random.PRNGKey(0)

    input_dim_critic = 24   # state feature dim
    action_dim = 8          # action dim -> concat dim = 32
    k_state, k_action, k_params = jax.random.split(key, 3)
    params = make_params(k_params, input_dim_critic, action_dim)

    # Small-shape check (single tile, padded batch).
    batch = 2
    state = jax.random.normal(k_state, (batch, input_dim_critic), jnp.float32)
    action = jax.random.normal(k_action, (batch, action_dim), jnp.float32)
    q = q_value_forward(state, action, params)
    jax.block_until_ready(q)
    q_ref = reference_forward(state, action, params)
    assert q.shape == (batch, 1)
    assert jnp.allclose(q, q_ref, atol=1e-4, rtol=1e-4), (q, q_ref)

    # Multi-tile + padding check (exercises grid, resident weights, output reshape).
    batch2 = 300
    k_s2, k_a2 = jax.random.split(k_state)
    state2 = jax.random.normal(k_s2, (batch2, input_dim_critic), jnp.float32)
    action2 = jax.random.normal(k_a2, (batch2, action_dim), jnp.float32)
    q2 = q_value_forward(state2, action2, params, tile_rows=128)
    jax.block_until_ready(q2)
    q2_ref = reference_forward(state2, action2, params)
    assert q2.shape == (batch2, 1)
    assert jnp.allclose(q2, q2_ref, atol=1e-4, rtol=1e-4)

    print("KERNEL_OK")
</pallas_src>

<mosaic_0001>
module attributes {stable_mosaic.version = 11 : i64} {
  func.func @_q_mlp_kernel(%arg0: i32, %arg1: memref<128x24xf32, #tpu.memory_space<vmem>>, %arg2: memref<128x8xf32, #tpu.memory_space<vmem>>, %arg3: memref<64x24xf32, #tpu.memory_space<vmem>>, %arg4: memref<64x8xf32, #tpu.memory_space<vmem>>, %arg5: memref<64x1xf32, #tpu.memory_space<vmem>>, %arg6: memref<64x64xf32, #tpu.memory_space<vmem>>, %arg7: memref<64x1xf32, #tpu.memory_space<vmem>>, %arg8: memref<1x64xf32, #tpu.memory_space<vmem>>, %arg9: memref<1xf32, #tpu.memory_space<smem>>, %arg10: memref<1x1x128xf32, #tpu.memory_space<vmem>>) attributes {dimension_semantics = [#tpu.dimension_semantics<parallel>], iteration_bounds = array<i64: 1>, scalar_prefetch = 0 : i64, scratch_operands = 0 : i64, tpu.core_type = #tpu.core_type<tc>, window_params = [{transform_indices = @transform_0, window_bounds = array<i64: 128, 24>}, {transform_indices = @transform_1, window_bounds = array<i64: 128, 8>}, {pipeline_mode = #tpu.pipeline_mode<synchronous>, transform_indices = @transform_2, window_bounds = array<i64: 64, 24>}, {pipeline_mode = #tpu.pipeline_mode<synchronous>, transform_indices = @transform_3, window_bounds = array<i64: 64, 8>}, {pipeline_mode = #tpu.pipeline_mode<synchronous>, transform_indices = @transform_4, window_bounds = array<i64: 64, 1>}, {pipeline_mode = #tpu.pipeline_mode<synchronous>, transform_indices = @transform_5, window_bounds = array<i64: 64, 64>}, {pipeline_mode = #tpu.pipeline_mode<synchronous>, transform_indices = @transform_6, window_bounds = array<i64: 64, 1>}, {pipeline_mode = #tpu.pipeline_mode<synchronous>, transform_indices = @transform_7, window_bounds = array<i64: 1, 64>}, {transform_indices = @transform_8, window_bounds = array<i64: 1>}, {transform_indices = @transform_9, window_bounds = array<i64: 1, 1, 128>}]} {
    %c0 = arith.constant 0 : index
    %c0_0 = arith.constant 0 : index
    %0 = vector.load %arg3[%c0, %c0_0] : memref<64x24xf32, #tpu.memory_space<vmem>>, vector<64x24xf32>
    %c0_1 = arith.constant 0 : index
    %c0_2 = arith.constant 0 : index
    %1 = vector.load %arg1[%c0_1, %c0_2] : memref<128x24xf32, #tpu.memory_space<vmem>>, vector<128x24xf32>
    %cst = arith.constant dense<0.000000e+00> : vector<64x128xf32>
    %2 = tpu.matmul %0, %1, %cst {dimension_numbers = #tpu.dot_dimension_numbers<[1], [1], [0], [0], [0, 0, 1, 0], [], []>} : vector<64x24xf32>, vector<128x24xf32>, vector<64x128xf32> -> vector<64x128xf32>
    %c0_3 = arith.constant 0 : index
    %c0_4 = arith.constant 0 : index
    %3 = vector.load %arg4[%c0_3, %c0_4] : memref<64x8xf32, #tpu.memory_space<vmem>>, vector<64x8xf32>
    %c0_5 = arith.constant 0 : index
    %c0_6 = arith.constant 0 : index
    %4 = vector.load %arg2[%c0_5, %c0_6] : memref<128x8xf32, #tpu.memory_space<vmem>>, vector<128x8xf32>
    %cst_7 = arith.constant dense<0.000000e+00> : vector<64x128xf32>
    %5 = tpu.matmul %3, %4, %cst_7 {dimension_numbers = #tpu.dot_dimension_numbers<[1], [1], [0], [0], [0, 0, 1, 0], [], []>} : vector<64x8xf32>, vector<128x8xf32>, vector<64x128xf32> -> vector<64x128xf32>
    %6 = arith.addf %2, %5 : vector<64x128xf32>
    %c0_8 = arith.constant 0 : index
    %c0_9 = arith.constant 0 : index
    %7 = vector.load %arg5[%c0_8, %c0_9] : memref<64x1xf32, #tpu.memory_space<vmem>>, vector<64x1xf32>
    %8 = vector.broadcast %7 : vector<64x1xf32> to vector<64x128xf32>
    %9 = arith.addf %6, %8 : vector<64x128xf32>
    %cst_10 = arith.constant 0.000000e+00 : f32
    %10 = vector.broadcast %cst_10 : f32 to vector<64x128xf32>
    %11 = arith.maximumf %9, %10 : vector<64x128xf32>
    %c0_11 = arith.constant 0 : index
    %c0_12 = arith.constant 0 : index
    %12 = vector.load %arg6[%c0_11, %c0_12] : memref<64x64xf32, #tpu.memory_space<vmem>>, vector<64x64xf32>
    %cst_13 = arith.constant dense<0.000000e+00> : vector<64x128xf32>
    %13 = tpu.matmul %12, %11, %cst_13 {dimension_numbers = #tpu.dot_dimension_numbers<[1], [0], [0], [1], [0, 0, 1, 1], [], []>} : vector<64x64xf32>, vector<64x128xf32>, vector<64x128xf32> -> vector<64x128xf32>
    %c0_14 = arith.constant 0 : index
    %c0_15 = arith.constant 0 : index
    %14 = vector.load %arg7[%c0_14, %c0_15] : memref<64x1xf32, #tpu.memory_space<vmem>>, vector<64x1xf32>
    %15 = vector.broadcast %14 : vector<64x1xf32> to vector<64x128xf32>
    %16 = arith.addf %13, %15 : vector<64x128xf32>
    %cst_16 = arith.constant 0.000000e+00 : f32
    %17 = vector.broadcast %cst_16 : f32 to vector<64x128xf32>
    %18 = arith.maximumf %16, %17 : vector<64x128xf32>
    %c0_17 = arith.constant 0 : index
    %c0_18 = arith.constant 0 : index
    %19 = vector.load %arg8[%c0_17, %c0_18] : memref<1x64xf32, #tpu.memory_space<vmem>>, vector<1x64xf32>
    %cst_19 = arith.constant dense<0.000000e+00> : vector<1x128xf32>
    %20 = tpu.matmul %19, %18, %cst_19 {dimension_numbers = #tpu.dot_dimension_numbers<[1], [0], [0], [1], [0, 0, 1, 1], [], []>} : vector<1x64xf32>, vector<64x128xf32>, vector<1x128xf32> -> vector<1x128xf32>
    %c0_20 = arith.constant 0 : index
    %21 = memref.load %arg9[%c0_20] : memref<1xf32, #tpu.memory_space<smem>>
    %22 = vector.broadcast %21 : f32 to vector<1x128xf32>
    %23 = arith.addf %20, %22 : vector<1x128xf32>
    %24 = vector.shape_cast %23 : vector<1x128xf32> to vector<1x1x128xf32>
    %c0_21 = arith.constant 0 : index
    %c0_22 = arith.constant 0 : index
    %c0_23 = arith.constant 0 : index
    %25 = vector.load %arg10[%c0_21, %c0_22, %c0_23] : memref<1x1x128xf32, #tpu.memory_space<vmem>>, vector<1x1x128xf32>
    tpu.vector_store %arg10[%c0_21, %c0_22, %c0_23], %24 {strides = array<i32>} : memref<1x1x128xf32, #tpu.memory_space<vmem>>, vector<1x1x128xf32>,
    return
  }
  func.func @transform_0(%arg0: i32) -> (i32, i32) {
    %c0_i32 = arith.constant 0 : i32
    %c0_i32_0 = arith.constant 0 : i32
    return %arg0, %c0_i32 : i32, i32
  }
  func.func @transform_1(%arg0: i32) -> (i32, i32) {
    %c0_i32 = arith.constant 0 : i32
    %c0_i32_0 = arith.constant 0 : i32
    return %arg0, %c0_i32 : i32, i32
  }
  func.func @transform_2(%arg0: i32) -> (i32, i32) {
    %c0_i32 = arith.constant 0 : i32
    %c0_i32_0 = arith.constant 0 : i32
    %c0_i32_1 = arith.constant 0 : i32
    return %c0_i32, %c0_i32_0 : i32, i32
  }
  func.func @transform_3(%arg0: i32) -> (i32, i32) {
    %c0_i32 = arith.constant 0 : i32
    %c0_i32_0 = arith.constant 0 : i32
    %c0_i32_1 = arith.constant 0 : i32
    return %c0_i32, %c0_i32_0 : i32, i32
  }
  func.func @transform_4(%arg0: i32) -> (i32, i32) {
    %c0_i32 = arith.constant 0 : i32
    %c0_i32_0 = arith.constant 0 : i32
    %c0_i32_1 = arith.constant 0 : i32
    return %c0_i32, %c0_i32_0 : i32, i32
  }
  func.func @transform_5(%arg0: i32) -> (i32, i32) {
    %c0_i32 = arith.constant 0 : i32
    %c0_i32_0 = arith.constant 0 : i32
    %c0_i32_1 = arith.constant 0 : i32
    return %c0_i32, %c0_i32_0 : i32, i32
  }
  func.func @transform_6(%arg0: i32) -> (i32, i32) {
    %c0_i32 = arith.constant 0 : i32
    %c0_i32_0 = arith.constant 0 : i32
    %c0_i32_1 = arith.constant 0 : i32
    return %c0_i32, %c0_i32_0 : i32, i32
  }
  func.func @transform_7(%arg0: i32) -> (i32, i32) {
    %c0_i32 = arith.constant 0 : i32
    %c0_i32_0 = arith.constant 0 : i32
    %c0_i32_1 = arith.constant 0 : i32
    return %c0_i32, %c0_i32_0 : i32, i32
  }
  func.func @transform_8(%arg0: i32) -> i32 {
    %c0_i32 = arith.constant 0 : i32
    %c0_i32_0 = arith.constant 0 : i32
    return %c0_i32 : i32
  }
  func.func @transform_9(%arg0: i32) -> (i32, i32, i32) {
    %c0_i32 = arith.constant 0 : i32
    %c0_i32_0 = arith.constant 0 : i32
    %c0_i32_1 = arith.constant 0 : i32
    return %arg0, %c0_i32, %c0_i32_0 : i32, i32, i32
  }
}

</mosaic_0001>

<llo_original>
// kernel: tpu_custom_call.1
$region0: #{tpu_custom_call.1}
  #allocation0 [shape = 'u32[]', space=smem, size = 0x4, offset = 0x4, fixed_abs, tag = 'smem constant byte address 0x4 - core index']
  #allocation1 [shape = 'u32[144,128]{1,0:T(1,128)}', space=vmem, size = 0x12000, scoped, tag = 'internal scratch']
  #allocation2 [shape = 'f32[1]{0:T(128)S(6)}', space=smem, size = 0x200, scoped, tag = 'scoped memory for tpu_custom_call.1']
  %s0 = inlined_call_operand.vmem [shape: f32[128,24], index: 0, kind: input, shape index: {}]
  %s1 = inlined_call_operand.vmem [shape: f32[128,8], index: 1, kind: input, shape index: {}]
  %s2 = inlined_call_operand.vmem [shape: f32[64,24], index: 2, kind: input, shape index: {}]
  %s3 = inlined_call_operand.vmem [shape: f32[64,8], index: 3, kind: input, shape index: {}]
  %s4 = inlined_call_operand.vmem [shape: f32[64,1], index: 4, kind: input, shape index: {}]
  %s5 = inlined_call_operand.vmem [shape: f32[64,64], index: 5, kind: input, shape index: {}]
  %s6 = inlined_call_operand.vmem [shape: f32[64,1], index: 6, kind: input, shape index: {}]
  %s7 = inlined_call_operand.vmem [shape: f32[1,64], index: 7, kind: input, shape index: {}]
  %s8 = inlined_call_operand.<no memory space> [shape: f32[1], index: 8, kind: input, shape index: {}]
  %s9 = inlined_call_operand.hbm [shape: f32[1,1,128], index: 9, kind: output, shape index: {}]
  %s10 = sld [smem:[#allocation0]]
  $region46: #{tpu_custom_call.1} parent=0
    _
  %s12 = ssub.s32 1, %s10
  %s13 = scalar_select 0, %s12, %s10
  %14 = sst [smem:[#allocation2]] %s8
  $region1: #{tpu_custom_call.1} parent=0
    #allocation3 [shape = 'u8[512]{0}', space=vmem, size = 0x400, scoped, tag = 'output window, operand 0, single buffered']
    #allocation4 [shape = 's32[1]{0}', space=sflag, size = 0x4, scoped, tag = 'scoped memory for tpu_custom_call.1']
    %15 = vsyncpa [#allocation4], 0
    // Predicated region
    $region2: #{tpu_custom_call.1} parent=1 // pred_check
      _
    $region3: #{tpu_custom_call.1} parent=1 // pred_check_branch
      %17 = sbr.rel (0) target = $region5
    $region4: #{tpu_custom_call.1} parent=1 // pred_region
      _
    $region5: #{tpu_custom_call.1} parent=1 // pred_fallthru
      _
    // Predicated region
    $region6: #{tpu_custom_call.1} parent=1 // pred_check
      _
    $region7: #{tpu_custom_call.1} parent=1 // pred_check_branch
      %19 = sbr.rel (0) target = $region9
    $region8: #{tpu_custom_call.1} parent=1 // pred_region
      _
    $region9: #{tpu_custom_call.1} parent=1 // pred_fallthru
      _
    // Predicated region
    $region10: #{tpu_custom_call.1} parent=1 // pred_check
      _
    $region11: #{tpu_custom_call.1} parent=1 // pred_check_branch
      %21 = sbr.rel (0) target = $region13
    $region12: #{tpu_custom_call.1} parent=1 // pred_region
      _
    $region13: #{tpu_custom_call.1} parent=1 // pred_fallthru
      _
    // Predicated region
    $region14: #{tpu_custom_call.1} parent=1 // pred_check
      _
    $region15: #{tpu_custom_call.1} parent=1 // pred_check_branch
      %23 = sbr.rel (0) target = $region17
    $region16: #{tpu_custom_call.1} parent=1 // pred_region
      _
    $region17: #{tpu_custom_call.1} parent=1 // pred_fallthru
      _
    // Predicated region
    $region18: #{tpu_custom_call.1} parent=1 // pred_check
      _
    $region19: #{tpu_custom_call.1} parent=1 // pred_check_branch
      %25 = sbr.rel (0) target = $region21
    $region20: #{tpu_custom_call.1} parent=1 // pred_region
      _
    $region21: #{tpu_custom_call.1} parent=1 // pred_fallthru
      _
    // Predicated region
    $region22: #{tpu_custom_call.1} parent=1 // pred_check
      _
    $region23: #{tpu_custom_call.1} parent=1 // pred_check_branch
      %27 = sbr.rel (0) target = $region25
    $region24: #{tpu_custom_call.1} parent=1 // pred_region
      _
    $region25: #{tpu_custom_call.1} parent=1 // pred_fallthru
      _
    // Predicated region
    $region26: #{tpu_custom_call.1} parent=1 // pred_check
      _
    $region27: #{tpu_custom_call.1} parent=1 // pred_check_branch
      %29 = sbr.rel (0) target = $region29
    $region28: #{tpu_custom_call.1} parent=1 // pred_region
      _
    $region29: #{tpu_custom_call.1} parent=1 // pred_fallthru
      _
    // Predicated region
    $region30: #{tpu_custom_call.1} parent=1 // pred_check
      _
    $region31: #{tpu_custom_call.1} parent=1 // pred_check_branch
      %31 = sbr.rel (0) target = $region33
    $region32: #{tpu_custom_call.1} parent=1 // pred_region
      _
    $region33: #{tpu_custom_call.1} parent=1 // pred_fallthru
      _
    // Predicated region
    $region34: #{tpu_custom_call.1} parent=1 // pred_check
      _
    $region35: #{tpu_custom_call.1} parent=1 // pred_check_branch
      %33 = sbr.rel (0) target = $region37
    $region36: #{tpu_custom_call.1} parent=1 // pred_region
      _
    $region37: #{tpu_custom_call.1} parent=1 // pred_fallthru
      _
    %v34 = vld [vmem:[%s2] sm:$0xff]
    %v35 = vld [vmem:[%s2 + $0x8] sm:$0xff]
    %v36 = vld [vmem:[%s2 + $0x10] sm:$0xff]
    %v37 = vld [vmem:[%s2 + $0x18] sm:$0xff]
    %v38 = vld [vmem:[%s2 + $0x20] sm:$0xff]
    %v39 = vld [vmem:[%s2 + $0x28] sm:$0xff]
    %v40 = vld [vmem:[%s2 + $0x30] sm:$0xff]
    %v41 = vld [vmem:[%s2 + $0x38] sm:$0xff]
    %v42 = vld [vmem:[%s0] sm:$0xff]
    %v43 = vld [vmem:[%s0 + $0x8] sm:$0xff]
    %v44 = vld [vmem:[%s0 + $0x10] sm:$0xff]
    %v45 = vld [vmem:[%s0 + $0x18] sm:$0xff]
    %v46 = vld [vmem:[%s0 + $0x20] sm:$0xff]
    %v47 = vld [vmem:[%s0 + $0x28] sm:$0xff]
    %v48 = vld [vmem:[%s0 + $0x30] sm:$0xff]
    %v49 = vld [vmem:[%s0 + $0x38] sm:$0xff]
    %v50 = vld [vmem:[%s0 + $0x40] sm:$0xff]
    %v51 = vld [vmem:[%s0 + $0x48] sm:$0xff]
    %v52 = vld [vmem:[%s0 + $0x50] sm:$0xff]
    %v53 = vld [vmem:[%s0 + $0x58] sm:$0xff]
    %v54 = vld [vmem:[%s0 + $0x60] sm:$0xff]
    %v55 = vld [vmem:[%s0 + $0x68] sm:$0xff]
    %v56 = vld [vmem:[%s0 + $0x70] sm:$0xff]
    %v57 = vld [vmem:[%s0 + $0x78] sm:$0xff]
    %v58 = vld [vmem:[%s3] sm:$0xff]
    %v59 = vld [vmem:[%s3 + $0x8] sm:$0xff]
    %v60 = vld [vmem:[%s3 + $0x10] sm:$0xff]
    %v61 = vld [vmem:[%s3 + $0x18] sm:$0xff]
    %v62 = vld [vmem:[%s3 + $0x20] sm:$0xff]
    %v63 = vld [vmem:[%s3 + $0x28] sm:$0xff]
    %v64 = vld [vmem:[%s3 + $0x30] sm:$0xff]
    %v65 = vld [vmem:[%s3 + $0x38] sm:$0xff]
    %v66 = vld [vmem:[%s1] sm:$0xff]
    %v67 = vld [vmem:[%s1 + $0x8] sm:$0xff]
    %v68 = vld [vmem:[%s1 + $0x10] sm:$0xff]
    %v69 = vld [vmem:[%s1 + $0x18] sm:$0xff]
    %v70 = vld [vmem:[%s1 + $0x20] sm:$0xff]
    %v71 = vld [vmem:[%s1 + $0x28] sm:$0xff]
    %v72 = vld [vmem:[%s1 + $0x30] sm:$0xff]
    %v73 = vld [vmem:[%s1 + $0x38] sm:$0xff]
    %v74 = vld [vmem:[%s1 + $0x40] sm:$0xff]
    %v75 = vld [vmem:[%s1 + $0x48] sm:$0xff]
    %v76 = vld [vmem:[%s1 + $0x50] sm:$0xff]
    %v77 = vld [vmem:[%s1 + $0x58] sm:$0xff]
    %v78 = vld [vmem:[%s1 + $0x60] sm:$0xff]
    %v79 = vld [vmem:[%s1 + $0x68] sm:$0xff]
    %v80 = vld [vmem:[%s1 + $0x70] sm:$0xff]
    %v81 = vld [vmem:[%s1 + $0x78] sm:$0xff]
    %vm82 = vcmask 64512
    %v84 = vsel %vm82, %v58, 0
    %v87 = vsel %vm82, %v59, 0
    %v90 = vsel %vm82, %v60, 0
    %v93 = vsel %vm82, %v61, 0
    %v96 = vsel %vm82, %v62, 0
    %v99 = vsel %vm82, %v63, 0
    %v102 = vsel %vm82, %v64, 0
    %v105 = vsel %vm82, %v65, 0
    %v108 = vsel %vm82, %v66, 0
    %v111 = vsel %vm82, %v67, 0
    %v114 = vsel %vm82, %v68, 0
    %v117 = vsel %vm82, %v69, 0
    %v120 = vsel %vm82, %v70, 0
    %v123 = vsel %vm82, %v71, 0
    %v126 = vsel %vm82, %v72, 0
    %v129 = vsel %vm82, %v73, 0
    %v132 = vsel %vm82, %v74, 0
    %v135 = vsel %vm82, %v75, 0
    %v138 = vsel %vm82, %v76, 0
    %v141 = vsel %vm82, %v77, 0
    %v144 = vsel %vm82, %v78, 0
    %v147 = vsel %vm82, %v79, 0
    %v150 = vsel %vm82, %v80, 0
    %v153 = vsel %vm82, %v81, 0
    %155 = vmatprep.subr.mxu0 0.0
    %156 = vmatpush1.xpose.msra.mxu0 %v108
    %157 = vmatprep.subr.mxu0 0.0
    %158 = vmatpush1.xpose.msra.mxu0 %v111
    %159 = vmatprep.subr.mxu0 0.0
    %160 = vmatpush1.xpose.msra.mxu0 %v114
    %161 = vmatprep.subr.mxu0 0.0
    %162 = vmatpush1.xpose.msra.mxu0 %v117
    %163 = vmatprep.subr.mxu0 0.0
    %164 = vmatpush1.xpose.msra.mxu0 %v120
    %165 = vmatprep.subr.mxu0 0.0
    %166 = vmatpush1.xpose.msra.mxu0 %v123
    %167 = vmatprep.subr.mxu0 0.0
    %168 = vmatpush1.xpose.msra.mxu0 %v126
    %169 = vmatprep.subr.mxu0 0.0
    %170 = vmatpush1.xpose.msra.mxu0 %v129
    %171 = vmatprep.subr.mxu0 0.0
    %172 = vmatpush1.xpose.msra.mxu0 %v132
    %173 = vmatprep.subr.mxu0 0.0
    %174 = vmatpush1.xpose.msra.mxu0 %v135
    %175 = vmatprep.subr.mxu0 0.0
    %176 = vmatpush1.xpose.msra.mxu0 %v138
    %177 = vmatprep.subr.mxu0 0.0
    %178 = vmatpush1.xpose.msra.mxu0 %v141
    %179 = vmatprep.subr.mxu0 0.0
    %180 = vmatpush1.xpose.msra.mxu0 %v144
    %181 = vmatprep.subr.mxu0 0.0
    %182 = vmatpush1.xpose.msra.mxu0 %v147
    %183 = vmatprep.subr.mxu0 0.0
    %184 = vmatpush1.xpose.msra.mxu0 %v150
    %185 = vmatprep.subr.mxu0 0.0
    %186 = vmatpush1.xpose.msra.mxu0 %v153
    %187 = vmatprep.subr.mxu0 0.0
    %188 = vmatpush1.xpose.msra.mxu0 0.0
    %189 = vmatprep.subr.mxu0 0.0
    %190 = vmatpush1.xpose.msra.mxu0 0.0
    %191 = vmatprep.subr.mxu0 0.0
    %192 = vmatpush1.xpose.msra.mxu0 0.0
    %193 = vmatprep.subr.mxu0 0.0
    %194 = vmatpush1.xpose.msra.mxu0 0.0
    %195 = vmatprep.subr.mxu0 0.0
    %196 = vmatpush1.xpose.msra.mxu0 0.0
    %197 = vmatprep.subr.mxu0 0.0
    %198 = vmatpush1.xpose.msra.mxu0 0.0
    %199 = vmatprep.subr.mxu0 0.0
    %200 = vmatpush1.xpose.msra.mxu0 0.0
    %201 = vmatprep.subr.mxu0 0.0
    %202 = vmatpush1.xpose.msra.mxu0 0.0
    %203 = vmatprep.subr.mxu0 0.0
    %204 = vmatpush1.xpose.msra.mxu0 0.0
    %205 = vmatprep.subr.mxu0 0.0
    %206 = vmatpush1.xpose.msra.mxu0 0.0
    %207 = vmatprep.subr.mxu0 0.0
    %208 = vmatpush1.xpose.msra.mxu0 0.0
    %209 = vmatprep.subr.mxu0 0.0
    %210 = vmatpush1.xpose.msra.mxu0 0.0
    %211 = vmatprep.subr.mxu0 0.0
    %212 = vmatpush1.xpose.msra.mxu0 0.0
    %213 = vmatprep.subr.mxu0 0.0
    %214 = vmatpush1.xpose.msra.mxu0 0.0
    %215 = vmatprep.subr.mxu0 0.0
    %216 = vmatpush1.xpose.msra.mxu0 0.0
    %217 = vmatprep.subr.mxu0 0.0
    %218 = vmatpush1.xpose.msra.mxu0 0.0
    %219 = vmatprep.mubr.f32.mxu0 0.0
    %220 = vmatmul.mubr.f32.gmra.mrb[0].mxu0 %v84
    %v221 = vpop.f32.mrb[0].mxu0
    %v222 = vadd.f32 0.0, %v221
    %v223 = vpop.f32.mrb[0].mxu0
    %224 = vmatprep.mubr.f32.mxu0 0.0
    %225 = vmatmul.mubr.f32.gmra.mrb[0].mxu0 %v87
    %v226 = vpop.f32.mrb[0].mxu0
    %v227 = vadd.f32 0.0, %v226
    %v228 = vpop.f32.mrb[0].mxu0
    %229 = vmatprep.mubr.f32.mxu0 0.0
    %230 = vmatmul.mubr.f32.gmra.mrb[0].mxu0 %v90
    %v231 = vpop.f32.mrb[0].mxu0
    %v232 = vadd.f32 0.0, %v231
    %v233 = vpop.f32.mrb[0].mxu0
    %234 = vmatprep.mubr.f32.mxu0 0.0
    %235 = vmatmul.mubr.f32.gmra.mrb[0].mxu0 %v93
    %v236 = vpop.f32.mrb[0].mxu0
    %v237 = vadd.f32 0.0, %v236
    %v238 = vpop.f32.mrb[0].mxu0
    %239 = vmatprep.mubr.f32.mxu0 0.0
    %240 = vmatmul.mubr.f32.gmra.mrb[0].mxu0 %v96
    %v241 = vpop.f32.mrb[0].mxu0
    %v242 = vadd.f32 0.0, %v241
    %v243 = vpop.f32.mrb[0].mxu0
    %244 = vmatprep.mubr.f32.mxu0 0.0
    %245 = vmatmul.mubr.f32.gmra.mrb[0].mxu0 %v99
    %v246 = vpop.f32.mrb[0].mxu0
    %v247 = vadd.f32 0.0, %v246
    %v248 = vpop.f32.mrb[0].mxu0
    %249 = vmatprep.mubr.f32.mxu0 0.0
    %250 = vmatmul.mubr.f32.gmra.mrb[0].mxu0 %v102
    %v251 = vpop.f32.mrb[0].mxu0
    %v252 = vadd.f32 0.0, %v251
    %v253 = vpop.f32.mrb[0].mxu0
    %254 = vmatprep.mubr.f32.mxu0 0.0
    %255 = vmatmul.mubr.f32.gmra.mrb[0].mxu0 %v105
    %v256 = vpop.f32.mrb[0].mxu0
    %v257 = vadd.f32 0.0, %v256
    %v258 = vpop.f32.mrb[0].mxu0
    %259 = vdwg.mxu0
    %vm260 = vcmask 195584
    %v262 = vsel %vm260, %v34, 0
    %v265 = vsel %vm260, %v35, 0
    %v268 = vsel %vm260, %v36, 0
    %v271 = vsel %vm260, %v37, 0
    %v274 = vsel %vm260, %v38, 0
    %v277 = vsel %vm260, %v39, 0
    %v280 = vsel %vm260, %v40, 0
    %v283 = vsel %vm260, %v41, 0
    %v286 = vsel %vm260, %v42, 0
    %v289 = vsel %vm260, %v43, 0
    %v292 = vsel %vm260, %v44, 0
    %v295 = vsel %vm260, %v45, 0
    %v298 = vsel %vm260, %v46, 0
    %v301 = vsel %vm260, %v47, 0
    %v304 = vsel %vm260, %v48, 0
    %v307 = vsel %vm260, %v49, 0
    %v310 = vsel %vm260, %v50, 0
    %v313 = vsel %vm260, %v51, 0
    %v316 = vsel %vm260, %v52, 0
    %v319 = vsel %vm260, %v53, 0
    %v322 = vsel %vm260, %v54, 0
    %v325 = vsel %vm260, %v55, 0
    %v328 = vsel %vm260, %v56, 0
    %v331 = vsel %vm260, %v57, 0
    %333 = vmatprep.subr.mxu0 0.0
    %334 = vmatpush1.xpose.msra.mxu0 %v286
    %335 = vmatprep.subr.mxu0 0.0
    %336 = vmatpush1.xpose.msra.mxu0 %v289
    %337 = vmatprep.subr.mxu0 0.0
    %338 = vmatpush1.xpose.msra.mxu0 %v292
    %339 = vmatprep.subr.mxu0 0.0
    %340 = vmatpush1.xpose.msra.mxu0 %v295
    %341 = vmatprep.subr.mxu0 0.0
    %342 = vmatpush1.xpose.msra.mxu0 %v298
    %343 = vmatprep.subr.mxu0 0.0
    %344 = vmatpush1.xpose.msra.mxu0 %v301
    %345 = vmatprep.subr.mxu0 0.0
    %346 = vmatpush1.xpose.msra.mxu0 %v304
    %347 = vmatprep.subr.mxu0 0.0
    %348 = vmatpush1.xpose.msra.mxu0 %v307
    %349 = vmatprep.subr.mxu0 0.0
    %350 = vmatpush1.xpose.msra.mxu0 %v310
    %351 = vmatprep.subr.mxu0 0.0
    %352 = vmatpush1.xpose.msra.mxu0 %v313
    %353 = vmatprep.subr.mxu0 0.0
    %354 = vmatpush1.xpose.msra.mxu0 %v316
    %355 = vmatprep.subr.mxu0 0.0
    %356 = vmatpush1.xpose.msra.mxu0 %v319
    %357 = vmatprep.subr.mxu0 0.0
    %358 = vmatpush1.xpose.msra.mxu0 %v322
    %359 = vmatprep.subr.mxu0 0.0
    %360 = vmatpush1.xpose.msra.mxu0 %v325
    %361 = vmatprep.subr.mxu0 0.0
    %362 = vmatpush1.xpose.msra.mxu0 %v328
    %363 = vmatprep.subr.mxu0 0.0
    %364 = vmatpush1.xpose.msra.mxu0 %v331
    %365 = vmatprep.subr.mxu0 0.0
    %366 = vmatpush1.xpose.msra.mxu0 0.0
    %367 = vmatprep.subr.mxu0 0.0
    %368 = vmatpush1.xpose.msra.mxu0 0.0
    %369 = vmatprep.subr.mxu0 0.0
    %370 = vmatpush1.xpose.msra.mxu0 0.0
    %371 = vmatprep.subr.mxu0 0.0
    %372 = vmatpush1.xpose.msra.mxu0 0.0
    %373 = vmatprep.subr.mxu0 0.0
    %374 = vmatpush1.xpose.msra.mxu0 0.0
    %375 = vmatprep.subr.mxu0 0.0
    %376 = vmatpush1.xpose.msra.mxu0 0.0
    %377 = vmatprep.subr.mxu0 0.0
    %378 = vmatpush1.xpose.msra.mxu0 0.0
    %379 = vmatprep.subr.mxu0 0.0
    %380 = vmatpush1.xpose.msra.mxu0 0.0
    %381 = vmatprep.subr.mxu0 0.0
    %382 = vmatpush1.xpose.msra.mxu0 0.0
    %383 = vmatprep.subr.mxu0 0.0
    %384 = vmatpush1.xpose.msra.mxu0 0.0
    %385 = vmatprep.subr.mxu0 0.0
    %386 = vmatpush1.xpose.msra.mxu0 0.0
    %387 = vmatprep.subr.mxu0 0.0
    %388 = vmatpush1.xpose.msra.mxu0 0.0
    %389 = vmatprep.subr.mxu0 0.0
    %390 = vmatpush1.xpose.msra.mxu0 0.0
    %391 = vmatprep.subr.mxu0 0.0
    %392 = vmatpush1.xpose.msra.mxu0 0.0
    %393 = vmatprep.subr.mxu0 0.0
    %394 = vmatpush1.xpose.msra.mxu0 0.0
    %395 = vmatprep.subr.mxu0 0.0
    %396 = vmatpush1.xpose.msra.mxu0 0.0
    %397 = vmatprep.mubr.f32.mxu0 0.0
    %398 = vmatmul.mubr.f32.gmra.mrb[0].mxu0 %v262
    %v399 = vpop.f32.mrb[0].mxu0
    %v400 = vadd.f32 %v222, %v399
    %v401 = vpop.f32.mrb[0].mxu0
    %402 = vmatprep.mubr.f32.mxu0 0.0
    %403 = vmatmul.mubr.f32.gmra.mrb[0].mxu0 %v265
    %v404 = vpop.f32.mrb[0].mxu0
    %v405 = vadd.f32 %v227, %v404
    %v406 = vpop.f32.mrb[0].mxu0
    %407 = vmatprep.mubr.f32.mxu0 0.0
    %408 = vmatmul.mubr.f32.gmra.mrb[0].mxu0 %v268
    %v409 = vpop.f32.mrb[0].mxu0
    %v410 = vadd.f32 %v232, %v409
    %v411 = vpop.f32.mrb[0].mxu0
    %412 = vmatprep.mubr.f32.mxu0 0.0
    %413 = vmatmul.mubr.f32.gmra.mrb[0].mxu0 %v271
    %v414 = vpop.f32.mrb[0].mxu0
    %v415 = vadd.f32 %v237, %v414
    %v416 = vpop.f32.mrb[0].mxu0
    %417 = vmatprep.mubr.f32.mxu0 0.0
    %418 = vmatmul.mubr.f32.gmra.mrb[0].mxu0 %v274
    %v419 = vpop.f32.mrb[0].mxu0
    %v420 = vadd.f32 %v242, %v419
    %v421 = vpop.f32.mrb[0].mxu0
    %422 = vmatprep.mubr.f32.mxu0 0.0
    %423 = vmatmul.mubr.f32.gmra.mrb[0].mxu0 %v277
    %v424 = vpop.f32.mrb[0].mxu0
    %v425 = vadd.f32 %v247, %v424
    %v426 = vpop.f32.mrb[0].mxu0
    %427 = vmatprep.mubr.f32.mxu0 0.0
    %428 = vmatmul.mubr.f32.gmra.mrb[0].mxu0 %v280
    %v429 = vpop.f32.mrb[0].mxu0
    %v430 = vadd.f32 %v252, %v429
    %v431 = vpop.f32.mrb[0].mxu0
    %432 = vmatprep.mubr.f32.mxu0 0.0
    %433 = vmatmul.mubr.f32.gmra.mrb[0].mxu0 %v283
    %v434 = vpop.f32.mrb[0].mxu0
    %v435 = vadd.f32 %v257, %v434
    %v436 = vpop.f32.mrb[0].mxu0
    %437 = vdwg.mxu0
    %v438 = vld [vmem:[%s4] sm:$0xff]
    %v439 = vld [vmem:[%s4 + $0x8] sm:$0xff]
    %v440 = vld [vmem:[%s4 + $0x10] sm:$0xff]
    %v441 = vld [vmem:[%s4 + $0x18] sm:$0xff]
    %v442 = vld [vmem:[%s4 + $0x20] sm:$0xff]
    %v443 = vld [vmem:[%s4 + $0x28] sm:$0xff]
    %v444 = vld [vmem:[%s4 + $0x30] sm:$0xff]
    %v445 = vld [vmem:[%s4 + $0x38] sm:$0xff]
    %447 = vset.pattern.permute.xlu0 0
    %448 = vperm.xlu0 %447, %v438
    %v449 = vpop.permute.xlu0 %448
    %452 = vset.pattern.permute.xlu0 0
    %453 = vperm.xlu0 %452, %v439
    %v454 = vpop.permute.xlu0 %453
    %457 = vset.pattern.permute.xlu0 0
    %458 = vperm.xlu0 %457, %v440
    %v459 = vpop.permute.xlu0 %458
    %462 = vset.pattern.permute.xlu0 0
    %463 = vperm.xlu0 %462, %v441
    %v464 = vpop.permute.xlu0 %463
    %467 = vset.pattern.permute.xlu0 0
    %468 = vperm.xlu0 %467, %v442
    %v469 = vpop.permute.xlu0 %468
    %472 = vset.pattern.permute.xlu0 0
    %473 = vperm.xlu0 %472, %v443
    %v474 = vpop.permute.xlu0 %473
    %477 = vset.pattern.permute.xlu0 0
    %478 = vperm.xlu0 %477, %v444
    %v479 = vpop.permute.xlu0 %478
    %482 = vset.pattern.permute.xlu0 0
    %483 = vperm.xlu0 %482, %v445
    %v484 = vpop.permute.xlu0 %483
    %v486 = vadd.f32 %v400, %v449
    %v487 = vadd.f32 %v405, %v454
    %v488 = vadd.f32 %v410, %v459
    %v489 = vadd.f32 %v415, %v464
    %v490 = vadd.f32 %v420, %v469
    %v491 = vadd.f32 %v425, %v474
    %v492 = vadd.f32 %v430, %v479
    %v493 = vadd.f32 %v435, %v484
    %v494 = vmax.f32 %v486, 0.0
    %v495 = vmax.f32 %v487, 0.0
    %v496 = vmax.f32 %v488, 0.0
    %v497 = vmax.f32 %v489, 0.0
    %v498 = vmax.f32 %v490, 0.0
    %v499 = vmax.f32 %v491, 0.0
    %v500 = vmax.f32 %v492, 0.0
    %v501 = vmax.f32 %v493, 0.0
    %v502 = vld [vmem:[%s5] sm:$0xff]
    %v503 = vld [vmem:[%s5 + $0x8] sm:$0xff]
    %v504 = vld [vmem:[%s5 + $0x10] sm:$0xff]
    %v505 = vld [vmem:[%s5 + $0x18] sm:$0xff]
    %v506 = vld [vmem:[%s5 + $0x20] sm:$0xff]
    %v507 = vld [vmem:[%s5 + $0x28] sm:$0xff]
    %v508 = vld [vmem:[%s5 + $0x30] sm:$0xff]
    %v509 = vld [vmem:[%s5 + $0x38] sm:$0xff]
    %v510 = vld [vmem:[%s6] sm:$0xff]
    %v511 = vld [vmem:[%s6 + $0x8] sm:$0xff]
    %v512 = vld [vmem:[%s6 + $0x10] sm:$0xff]
    %v513 = vld [vmem:[%s6 + $0x18] sm:$0xff]
    %v514 = vld [vmem:[%s6 + $0x20] sm:$0xff]
    %v515 = vld [vmem:[%s6 + $0x28] sm:$0xff]
    %v516 = vld [vmem:[%s6 + $0x30] sm:$0xff]
    %v517 = vld [vmem:[%s6 + $0x38] sm:$0xff]
    %519 = vset.pattern.permute.xlu0 0
    %520 = vperm.xlu0 %519, %v510
    %v521 = vpop.permute.xlu0 %520
    %524 = vset.pattern.permute.xlu0 0
    %525 = vperm.xlu0 %524, %v511
    %v526 = vpop.permute.xlu0 %525
    %529 = vset.pattern.permute.xlu0 0
    %530 = vperm.xlu0 %529, %v512
    %v531 = vpop.permute.xlu0 %530
    %534 = vset.pattern.permute.xlu0 0
    %535 = vperm.xlu0 %534, %v513
    %v536 = vpop.permute.xlu0 %535
    %539 = vset.pattern.permute.xlu0 0
    %540 = vperm.xlu0 %539, %v514
    %v541 = vpop.permute.xlu0 %540
    %544 = vset.pattern.permute.xlu0 0
    %545 = vperm.xlu0 %544, %v515
    %v546 = vpop.permute.xlu0 %545
    %549 = vset.pattern.permute.xlu0 0
    %550 = vperm.xlu0 %549, %v516
    %v551 = vpop.permute.xlu0 %550
    %554 = vset.pattern.permute.xlu0 0
    %555 = vperm.xlu0 %554, %v517
    %v556 = vpop.permute.xlu0 %555
    %vm558 = vcmask 523264
    %v560 = vsel %vm558, %v502, 0
    %v563 = vsel %vm558, %v503, 0
    %v566 = vsel %vm558, %v504, 0
    %v569 = vsel %vm558, %v505, 0
    %v572 = vsel %vm558, %v506, 0
    %v575 = vsel %vm558, %v507, 0
    %v578 = vsel %vm558, %v508, 0
    %v581 = vsel %vm558, %v509, 0
    %583 = vmatprep.subr.mxu0 0.0
    %584 = vmatpush1.msra.mxu0 %v494
    %585 = vmatprep.subr.mxu0 0.0
    %586 = vmatpush1.msra.mxu0 %v495
    %587 = vmatprep.subr.mxu0 0.0
    %588 = vmatpush1.msra.mxu0 %v496
    %589 = vmatprep.subr.mxu0 0.0
    %590 = vmatpush1.msra.mxu0 %v497
    %591 = vmatprep.subr.mxu0 0.0
    %592 = vmatpush1.msra.mxu0 %v498
    %593 = vmatprep.subr.mxu0 0.0
    %594 = vmatpush1.msra.mxu0 %v499
    %595 = vmatprep.subr.mxu0 0.0
    %596 = vmatpush1.msra.mxu0 %v500
    %597 = vmatprep.subr.mxu0 0.0
    %598 = vmatpush1.msra.mxu0 %v501
    %599 = vmatprep.subr.mxu0 0.0
    %600 = vmatpush1.msra.mxu0 0.0
    %601 = vmatprep.subr.mxu0 0.0
    %602 = vmatpush1.msra.mxu0 0.0
    %603 = vmatprep.subr.mxu0 0.0
    %604 = vmatpush1.msra.mxu0 0.0
    %605 = vmatprep.subr.mxu0 0.0
    %606 = vmatpush1.msra.mxu0 0.0
    %607 = vmatprep.subr.mxu0 0.0
    %608 = vmatpush1.msra.mxu0 0.0
    %609 = vmatprep.subr.mxu0 0.0
    %610 = vmatpush1.msra.mxu0 0.0
    %611 = vmatprep.subr.mxu0 0.0
    %612 = vmatpush1.msra.mxu0 0.0
    %613 = vmatprep.subr.mxu0 0.0
    %614 = vmatpush1.msra.mxu0 0.0
    %615 = vmatprep.subr.mxu0 0.0
    %616 = vmatpush1.msra.mxu0 0.0
    %617 = vmatprep.subr.mxu0 0.0
    %618 = vmatpush1.msra.mxu0 0.0
    %619 = vmatprep.subr.mxu0 0.0
    %620 = vmatpush1.msra.mxu0 0.0
    %621 = vmatprep.subr.mxu0 0.0
    %622 = vmatpush1.msra.mxu0 0.0
    %623 = vmatprep.subr.mxu0 0.0
    %624 = vmatpush1.msra.mxu0 0.0
    %625 = vmatprep.subr.mxu0 0.0
    %626 = vmatpush1.msra.mxu0 0.0
    %627 = vmatprep.subr.mxu0 0.0
    %628 = vmatpush1.msra.mxu0 0.0
    %629 = vmatprep.subr.mxu0 0.0
    %630 = vmatpush1.msra.mxu0 0.0
    %631 = vmatprep.subr.mxu0 0.0
    %632 = vmatpush1.msra.mxu0 0.0
    %633 = vmatprep.subr.mxu0 0.0
    %634 = vmatpush1.msra.mxu0 0.0
    %635 = vmatprep.subr.mxu0 0.0
    %636 = vmatpush1.msra.mxu0 0.0
    %637 = vmatprep.subr.mxu0 0.0
    %638 = vmatpush1.msra.mxu0 0.0
    %639 = vmatprep.subr.mxu0 0.0
    %640 = vmatpush1.msra.mxu0 0.0
    %641 = vmatprep.subr.mxu0 0.0
    %642 = vmatpush1.msra.mxu0 0.0
    %643 = vmatprep.subr.mxu0 0.0
    %644 = vmatpush1.msra.mxu0 0.0
    %645 = vmatprep.subr.mxu0 0.0
    %646 = vmatpush1.msra.mxu0 0.0
    %647 = vmatprep.mubr.f32.mxu0 0.0
    %648 = vmatmul.mubr.f32.gmra.mrb[0].mxu0 %v560
    %v649 = vpop.f32.mrb[0].mxu0
    %v650 = vadd.f32 %v521, %v649
    %v651 = vpop.f32.mrb[0].mxu0
    %652 = vmatprep.mubr.f32.mxu0 0.0
    %653 = vmatmul.mubr.f32.gmra.mrb[0].mxu0 %v563
    %v654 = vpop.f32.mrb[0].mxu0
    %v655 = vadd.f32 %v526, %v654
    %v656 = vpop.f32.mrb[0].mxu0
    %657 = vmatprep.mubr.f32.mxu0 0.0
    %658 = vmatmul.mubr.f32.gmra.mrb[0].mxu0 %v566
    %v659 = vpop.f32.mrb[0].mxu0
    %v660 = vadd.f32 %v531, %v659
    %v661 = vpop.f32.mrb[0].mxu0
    %662 = vmatprep.mubr.f32.mxu0 0.0
    %663 = vmatmul.mubr.f32.gmra.mrb[0].mxu0 %v569
    %v664 = vpop.f32.mrb[0].mxu0
    %v665 = vadd.f32 %v536, %v664
    %v666 = vpop.f32.mrb[0].mxu0
    %667 = vmatprep.mubr.f32.mxu0 0.0
    %668 = vmatmul.mubr.f32.gmra.mrb[0].mxu0 %v572
    %v669 = vpop.f32.mrb[0].mxu0
    %v670 = vadd.f32 %v541, %v669
    %v671 = vpop.f32.mrb[0].mxu0
    %672 = vmatprep.mubr.f32.mxu0 0.0
    %673 = vmatmul.mubr.f32.gmra.mrb[0].mxu0 %v575
    %v674 = vpop.f32.mrb[0].mxu0
    %v675 = vadd.f32 %v546, %v674
    %v676 = vpop.f32.mrb[0].mxu0
    %677 = vmatprep.mubr.f32.mxu0 0.0
    %678 = vmatmul.mubr.f32.gmra.mrb[0].mxu0 %v578
    %v679 = vpop.f32.mrb[0].mxu0
    %v680 = vadd.f32 %v551, %v679
    %v681 = vpop.f32.mrb[0].mxu0
    %682 = vmatprep.mubr.f32.mxu0 0.0
    %683 = vmatmul.mubr.f32.gmra.mrb[0].mxu0 %v581
    %v684 = vpop.f32.mrb[0].mxu0
    %v685 = vadd.f32 %v556, %v684
    %v686 = vpop.f32.mrb[0].mxu0
    %687 = vdwg.mxu0
    %v688 = vmax.f32 %v650, 0.0
    %v689 = vmax.f32 %v655, 0.0
    %v690 = vmax.f32 %v660, 0.0
    %v691 = vmax.f32 %v665, 0.0
    %v692 = vmax.f32 %v670, 0.0
    %v693 = vmax.f32 %v675, 0.0
    %v694 = vmax.f32 %v680, 0.0
    %v695 = vmax.f32 %v685, 0.0
    %v696 = vld [vmem:[%s7] sm:$0x1]
    %s697 = sld [smem:[#allocation2]]
    %v698 = vstv %s697
    %v700 = vsel %vm558, %v696, 0
    %702 = vmatprep.subr.mxu0 0.0
    %703 = vmatpush1.msra.mxu0 %v688
    %704 = vmatprep.subr.mxu0 0.0
    %705 = vmatpush1.msra.mxu0 %v689
    %706 = vmatprep.subr.mxu0 0.0
    %707 = vmatpush1.msra.mxu0 %v690
    %708 = vmatprep.subr.mxu0 0.0
    %709 = vmatpush1.msra.mxu0 %v691
    %710 = vmatprep.subr.mxu0 0.0
    %711 = vmatpush1.msra.mxu0 %v692
    %712 = vmatprep.subr.mxu0 0.0
    %713 = vmatpush1.msra.mxu0 %v693
    %714 = vmatprep.subr.mxu0 0.0
    %715 = vmatpush1.msra.mxu0 %v694
    %716 = vmatprep.subr.mxu0 0.0
    %717 = vmatpush1.msra.mxu0 %v695
    %718 = vmatprep.subr.mxu0 0.0
    %719 = vmatpush1.msra.mxu0 0.0
    %720 = vmatprep.subr.mxu0 0.0
    %721 = vmatpush1.msra.mxu0 0.0
    %722 = vmatprep.subr.mxu0 0.0
    %723 = vmatpush1.msra.mxu0 0.0
    %724 = vmatprep.subr.mxu0 0.0
    %725 = vmatpush1.msra.mxu0 0.0
    %726 = vmatprep.subr.mxu0 0.0
    %727 = vmatpush1.msra.mxu0 0.0
    %728 = vmatprep.subr.mxu0 0.0
    %729 = vmatpush1.msra.mxu0 0.0
    %730 = vmatprep.subr.mxu0 0.0
    %731 = vmatpush1.msra.mxu0 0.0
    %732 = vmatprep.subr.mxu0 0.0
    %733 = vmatpush1.msra.mxu0 0.0
    %734 = vmatprep.subr.mxu0 0.0
    %735 = vmatpush1.msra.mxu0 0.0
    %736 = vmatprep.subr.mxu0 0.0
    %737 = vmatpush1.msra.mxu0 0.0
    %738 = vmatprep.subr.mxu0 0.0
    %739 = vmatpush1.msra.mxu0 0.0
    %740 = vmatprep.subr.mxu0 0.0
    %741 = vmatpush1.msra.mxu0 0.0
    %742 = vmatprep.subr.mxu0 0.0
    %743 = vmatpush1.msra.mxu0 0.0
    %744 = vmatprep.subr.mxu0 0.0
    %745 = vmatpush1.msra.mxu0 0.0
    %746 = vmatprep.subr.mxu0 0.0
    %747 = vmatpush1.msra.mxu0 0.0
    %748 = vmatprep.subr.mxu0 0.0
    %749 = vmatpush1.msra.mxu0 0.0
    %750 = vmatprep.subr.mxu0 0.0
    %751 = vmatpush1.msra.mxu0 0.0
    %752 = vmatprep.subr.mxu0 0.0
    %753 = vmatpush1.msra.mxu0 0.0
    %754 = vmatprep.subr.mxu0 0.0
    %755 = vmatpush1.msra.mxu0 0.0
    %756 = vmatprep.subr.mxu0 0.0
    %757 = vmatpush1.msra.mxu0 0.0
    %758 = vmatprep.subr.mxu0 0.0
    %759 = vmatpush1.msra.mxu0 0.0
    %760 = vmatprep.subr.mxu0 0.0
    %761 = vmatpush1.msra.mxu0 0.0
    %762 = vmatprep.subr.mxu0 0.0
    %763 = vmatpush1.msra.mxu0 0.0
    %764 = vmatprep.subr.mxu0 0.0
    %765 = vmatpush1.msra.mxu0 0.0
    %766 = vmatprep.mubr.f32.mxu0 0.0
    %767 = vmatmul.mubr.f32.gmra.mrb[0].mxu0 %v700
    %v768 = vpop.f32.mrb[0].mxu0
    %v769 = vadd.f32 %v698, %v768
    %v770 = vpop.f32.mrb[0].mxu0
    %771 = vdwg.mxu0
    %772 = vst [vmem:[#allocation3] sm:$0x1] %v769
    // Predicated region
    $region38: #{tpu_custom_call.1} parent=1 // pred_check
      _
    $region39: #{tpu_custom_call.1} parent=1 // pred_check_branch
      %774 = sbr.rel (0) target = $region41
    $region40: #{tpu_custom_call.1} parent=1 // pred_region
      %s776 = ssub.s32 16, 16
      %777 = vsyncadd [#allocation4], %s776
      %s779 = sshll.u32 [#allocation3], 4
      %s780 = int_to_ptr.vmem [resolvable:$true] %s779
      %782 = dma.vmem_to_hbm [thread:$0]  %s780, 16, %s9, [#allocation4]
    $region41: #{tpu_custom_call.1} parent=1 // pred_fallthru
      _
    // Predicated region
    $region42: #{tpu_custom_call.1} parent=1 // pred_check
      _
    $region43: #{tpu_custom_call.1} parent=1 // pred_check_branch
      %784 = sbr.rel (0) target = $region45
    $region44: #{tpu_custom_call.1} parent=1 // pred_region
      %785 = dma.done [#allocation4], 16
    $region45: #{tpu_custom_call.1} parent=1 // pred_fallthru
      _
    %786 = vsyncpa [#allocation4], 1

</llo_original>
